<compile_context>
chip_gen: v7x
topology: tpu7x:2x2x1
jax: 0.10.0
libtpu: 0.0.40
codegen_flags: <defaults>
</compile_context>

<pallas_src>
import jax
import jax.numpy as jnp
from jax.experimental import pallas as pl
from jax.experimental.pallas import tpu as pltpu

# Packed-parameter layout inside the flat f32[64] SMEM array.
_W1_OFF = 0    # w1 (8,2) row-major: w1[j, i] at 2*j + i
_B1_OFF = 16   # b1 (8,)
_W2_OFF = 24   # w2 (3,8) row-major: w2[k, j] at 24 + 8*k + j
_B2_OFF = 48   # b2 (3,)
_P_LEN = 64    # padded to a power-of-two-friendly size


def policy_mlp_kernel(p_ref, x_ref, out_ref):
    """Fused 2-layer MLP on a batch tile, batch dense on (sublane, lane).

    p_ref   : SMEM f32[64]          packed (w1, b1, w2, b2)
    x_ref   : VMEM f32[2, TS, 128]  states, batch on sublanes x lanes
    out_ref : VMEM f32[3, TS, 128]  logits, batch on sublanes x lanes
    """
    x0 = x_ref[0]                           # (TS, 128) fully dense vregs
    x1 = x_ref[1]                           # (TS, 128)

    # fc1 + ReLU: h_j = relu(w1[j,0]*x0 + w1[j,1]*x1 + b1[j])   (VPU MACs)
    h = []
    for j in range(8):
        hj = (x0 * p_ref[_W1_OFF + 2 * j]
              + x1 * p_ref[_W1_OFF + 2 * j + 1]
              + p_ref[_B1_OFF + j])
        h.append(jnp.maximum(hj, 0.0))

    # fc2: y_k = sum_j w2[k,j]*h_j + b2[k]; direct full-vreg row stores.
    for k in range(3):
        acc = h[0] * p_ref[_W2_OFF + 8 * k]
        for j in range(1, 8):
            acc = acc + h[j] * p_ref[_W2_OFF + 8 * k + j]
        out_ref[k] = acc + p_ref[_B2_OFF + k]


def pack_params(w1, b1, w2, b2):
    """One-time preprocessing: pack PyTorch-layout params into a flat f32[64]."""
    p = jnp.zeros((_P_LEN,), jnp.float32)
    p = p.at[_W1_OFF:_W1_OFF + 16].set(jnp.asarray(w1, jnp.float32).reshape(-1))
    p = p.at[_B1_OFF:_B1_OFF + 8].set(jnp.asarray(b1, jnp.float32).reshape(-1))
    p = p.at[_W2_OFF:_W2_OFF + 24].set(jnp.asarray(w2, jnp.float32).reshape(-1))
    p = p.at[_B2_OFF:_B2_OFF + 3].set(jnp.asarray(b2, jnp.float32).reshape(-1))
    return p


def _batch_tiling(b):
    """Batch tiling: tile multiple of 1024 (sublane block multiple of 8),
    capped at 16384; >= 2 balanced grid steps for large batches (v7x 2 TCs)."""
    b_pad = max(1024, ((b + 1023) // 1024) * 1024)
    if b_pad <= 1024:
        return 1024, 1024
    tile = min(16384, ((b_pad // 2 + 1023) // 1024) * 1024)
    b_pad = ((b_pad + tile - 1) // tile) * tile
    return tile, b_pad


def policy_network_forward(params_packed, x):
    """x: (B, 2) f32 states -> (B, 3) f32 logits (PyTorch-compatible interface)."""
    B = x.shape[0]
    tile, b_pad = _batch_tiling(B)
    ts = tile // 128                 # sublane rows per grid step
    S = b_pad // 128                 # total sublane rows

    # Layout glue: batch onto (sublane, lane).  Transpose + pad + row-major
    # reshape; no zeros+scatter pass.
    x_t = jnp.pad(jnp.asarray(x, jnp.float32).T, ((0, 0), (0, b_pad - B)))
    x_t = x_t.reshape(2, S, 128)

    out_t = pl.pallas_call(
        policy_mlp_kernel,
        out_shape=jax.ShapeDtypeStruct((3, S, 128), jnp.float32),
        grid=(b_pad // tile,),
        in_specs=[
            pl.BlockSpec(memory_space=pltpu.MemorySpace.SMEM),       # packed params
            pl.BlockSpec((2, ts, 128), lambda i: (0, i, 0)),         # x tile
        ],
        out_specs=pl.BlockSpec((3, ts, 128), lambda i: (0, i, 0)),   # logits tile
        compiler_params=pltpu.CompilerParams(
            dimension_semantics=("parallel",)),                      # 2 TCs on v7x
    )(params_packed, x_t)

    return out_t.reshape(3, b_pad)[:, :B].T                          # (B, 3)


# Jit the wrapper once; parameter packing stays out of the hot path.
policy_network_forward_jit = jax.jit(policy_network_forward)


def init_params(key):
    """Deterministic init mimicking nn.Linear's U(-1/sqrt(fan_in), 1/sqrt(fan_in))."""
    k1, k2, k3, k4 = jax.random.split(key, 4)
    lim1 = 1.0 / jnp.sqrt(2.0)   # fc1: fan_in = 2
    lim2 = 1.0 / jnp.sqrt(8.0)   # fc2: fan_in = 8
    w1 = jax.random.uniform(k1, (8, 2), jnp.float32, -lim1, lim1)
    b1 = jax.random.uniform(k2, (8,), jnp.float32, -lim1, lim1)
    w2 = jax.random.uniform(k3, (3, 8), jnp.float32, -lim2, lim2)
    b2 = jax.random.uniform(k4, (3,), jnp.float32, -lim2, lim2)
    return w1, b1, w2, b2


def reference_forward(x, w1, b1, w2, b2):
    """Pure-JAX reference (matches PyTorch semantics)."""
    h = jnp.maximum(x @ w1.T + b1, 0.0)
    return h @ w2.T + b2


if __name__ == "__main__":
    key = jax.random.PRNGKey(0)
    kx, kx2, kx3, kp = jax.random.split(key, 4)

    w1, b1, w2, b2 = init_params(kp)
    params_packed = pack_params(w1, b1, w2, b2)   # one-time preprocessing

    # Small nominal batch of 2-d MountainCar states (single grid step).
    B = 8
    x = jax.random.normal(kx, (B, 2), jnp.float32)
    out = jax.block_until_ready(policy_network_forward_jit(params_packed, x))
    ref = reference_forward(x, w1, b1, w2, b2)
    assert out.shape == (B, 3), out.shape
    assert jnp.allclose(out, ref, atol=1e-5, rtol=1e-5), "mismatch vs reference (B=8)"

    # Non-multiple-of-tile batch: exercises padding + 2-step parallel grid.
    B2 = 2500
    x2 = jax.random.normal(kx2, (B2, 2), jnp.float32)
    out2 = jax.block_until_ready(policy_network_forward_jit(params_packed, x2))
    ref2 = reference_forward(x2, w1, b1, w2, b2)
    assert out2.shape == (B2, 3), out2.shape
    assert jnp.allclose(out2, ref2, atol=1e-5, rtol=1e-5), "mismatch vs reference (B=2500)"

    # Large batch: exercises the big (>=8192-lane) tiles with dense vregs.
    B3 = 20000
    x3 = jax.random.normal(kx3, (B3, 2), jnp.float32)
    out3 = jax.block_until_ready(policy_network_forward_jit(params_packed, x3))
    ref3 = reference_forward(x3, w1, b1, w2, b2)
    assert out3.shape == (B3, 3), out3.shape
    assert jnp.allclose(out3, ref3, atol=1e-5, rtol=1e-5), "mismatch vs reference (B=20000)"

    print("KERNEL_OK")
</pallas_src>

<mosaic_0001>
module attributes {stable_mosaic.version = 11 : i64} {
  func.func @policy_mlp_kernel(%arg0: i32, %arg1: memref<64xf32, #tpu.memory_space<smem>>, %arg2: memref<2x8x128xf32, #tpu.memory_space<vmem>>, %arg3: memref<3x8x128xf32, #tpu.memory_space<vmem>>) attributes {dimension_semantics = [#tpu.dimension_semantics<parallel>], iteration_bounds = array<i64: 1>, scalar_prefetch = 0 : i64, scratch_operands = 0 : i64, tpu.core_type = #tpu.core_type<tc>, window_params = [{transform_indices = @transform_0, window_bounds = array<i64: 64>}, {transform_indices = @transform_1, window_bounds = array<i64: 2, 8, 128>}, {transform_indices = @transform_2, window_bounds = array<i64: 3, 8, 128>}]} {
    %c0 = arith.constant 0 : index
    %c0_0 = arith.constant 0 : index
    %c0_1 = arith.constant 0 : index
    %0 = vector.load %arg2[%c0, %c0_0, %c0_1] : memref<2x8x128xf32, #tpu.memory_space<vmem>>, vector<1x8x128xf32>
    %1 = vector.shape_cast %0 : vector<1x8x128xf32> to vector<8x128xf32>
    %c1 = arith.constant 1 : index
    %c0_2 = arith.constant 0 : index
    %c0_3 = arith.constant 0 : index
    %2 = vector.load %arg2[%c1, %c0_2, %c0_3] : memref<2x8x128xf32, #tpu.memory_space<vmem>>, vector<1x8x128xf32>
    %3 = vector.shape_cast %2 : vector<1x8x128xf32> to vector<8x128xf32>
    %c0_4 = arith.constant 0 : index
    %4 = memref.load %arg1[%c0_4] : memref<64xf32, #tpu.memory_space<smem>>
    %5 = vector.broadcast %4 : f32 to vector<8x128xf32>
    %6 = arith.mulf %1, %5 : vector<8x128xf32>
    %c1_5 = arith.constant 1 : index
    %7 = memref.load %arg1[%c1_5] : memref<64xf32, #tpu.memory_space<smem>>
    %8 = vector.broadcast %7 : f32 to vector<8x128xf32>
    %9 = arith.mulf %3, %8 : vector<8x128xf32>
    %10 = arith.addf %6, %9 : vector<8x128xf32>
    %c16 = arith.constant 16 : index
    %11 = memref.load %arg1[%c16] : memref<64xf32, #tpu.memory_space<smem>>
    %12 = vector.broadcast %11 : f32 to vector<8x128xf32>
    %13 = arith.addf %10, %12 : vector<8x128xf32>
    %cst = arith.constant 0.000000e+00 : f32
    %14 = vector.broadcast %cst : f32 to vector<8x128xf32>
    %15 = arith.maximumf %13, %14 : vector<8x128xf32>
    %c2 = arith.constant 2 : index
    %16 = memref.load %arg1[%c2] : memref<64xf32, #tpu.memory_space<smem>>
    %17 = vector.broadcast %16 : f32 to vector<8x128xf32>
    %18 = arith.mulf %1, %17 : vector<8x128xf32>
    %c3 = arith.constant 3 : index
    %19 = memref.load %arg1[%c3] : memref<64xf32, #tpu.memory_space<smem>>
    %20 = vector.broadcast %19 : f32 to vector<8x128xf32>
    %21 = arith.mulf %3, %20 : vector<8x128xf32>
    %22 = arith.addf %18, %21 : vector<8x128xf32>
    %c17 = arith.constant 17 : index
    %23 = memref.load %arg1[%c17] : memref<64xf32, #tpu.memory_space<smem>>
    %24 = vector.broadcast %23 : f32 to vector<8x128xf32>
    %25 = arith.addf %22, %24 : vector<8x128xf32>
    %cst_6 = arith.constant 0.000000e+00 : f32
    %26 = vector.broadcast %cst_6 : f32 to vector<8x128xf32>
    %27 = arith.maximumf %25, %26 : vector<8x128xf32>
    %c4 = arith.constant 4 : index
    %28 = memref.load %arg1[%c4] : memref<64xf32, #tpu.memory_space<smem>>
    %29 = vector.broadcast %28 : f32 to vector<8x128xf32>
    %30 = arith.mulf %1, %29 : vector<8x128xf32>
    %c5 = arith.constant 5 : index
    %31 = memref.load %arg1[%c5] : memref<64xf32, #tpu.memory_space<smem>>
    %32 = vector.broadcast %31 : f32 to vector<8x128xf32>
    %33 = arith.mulf %3, %32 : vector<8x128xf32>
    %34 = arith.addf %30, %33 : vector<8x128xf32>
    %c18 = arith.constant 18 : index
    %35 = memref.load %arg1[%c18] : memref<64xf32, #tpu.memory_space<smem>>
    %36 = vector.broadcast %35 : f32 to vector<8x128xf32>
    %37 = arith.addf %34, %36 : vector<8x128xf32>
    %cst_7 = arith.constant 0.000000e+00 : f32
    %38 = vector.broadcast %cst_7 : f32 to vector<8x128xf32>
    %39 = arith.maximumf %37, %38 : vector<8x128xf32>
    %c6 = arith.constant 6 : index
    %40 = memref.load %arg1[%c6] : memref<64xf32, #tpu.memory_space<smem>>
    %41 = vector.broadcast %40 : f32 to vector<8x128xf32>
    %42 = arith.mulf %1, %41 : vector<8x128xf32>
    %c7 = arith.constant 7 : index
    %43 = memref.load %arg1[%c7] : memref<64xf32, #tpu.memory_space<smem>>
    %44 = vector.broadcast %43 : f32 to vector<8x128xf32>
    %45 = arith.mulf %3, %44 : vector<8x128xf32>
    %46 = arith.addf %42, %45 : vector<8x128xf32>
    %c19 = arith.constant 19 : index
    %47 = memref.load %arg1[%c19] : memref<64xf32, #tpu.memory_space<smem>>
    %48 = vector.broadcast %47 : f32 to vector<8x128xf32>
    %49 = arith.addf %46, %48 : vector<8x128xf32>
    %cst_8 = arith.constant 0.000000e+00 : f32
    %50 = vector.broadcast %cst_8 : f32 to vector<8x128xf32>
    %51 = arith.maximumf %49, %50 : vector<8x128xf32>
    %c8 = arith.constant 8 : index
    %52 = memref.load %arg1[%c8] : memref<64xf32, #tpu.memory_space<smem>>
    %53 = vector.broadcast %52 : f32 to vector<8x128xf32>
    %54 = arith.mulf %1, %53 : vector<8x128xf32>
    %c9 = arith.constant 9 : index
    %55 = memref.load %arg1[%c9] : memref<64xf32, #tpu.memory_space<smem>>
    %56 = vector.broadcast %55 : f32 to vector<8x128xf32>
    %57 = arith.mulf %3, %56 : vector<8x128xf32>
    %58 = arith.addf %54, %57 : vector<8x128xf32>
    %c20 = arith.constant 20 : index
    %59 = memref.load %arg1[%c20] : memref<64xf32, #tpu.memory_space<smem>>
    %60 = vector.broadcast %59 : f32 to vector<8x128xf32>
    %61 = arith.addf %58, %60 : vector<8x128xf32>
    %cst_9 = arith.constant 0.000000e+00 : f32
    %62 = vector.broadcast %cst_9 : f32 to vector<8x128xf32>
    %63 = arith.maximumf %61, %62 : vector<8x128xf32>
    %c10 = arith.constant 10 : index
    %64 = memref.load %arg1[%c10] : memref<64xf32, #tpu.memory_space<smem>>
    %65 = vector.broadcast %64 : f32 to vector<8x128xf32>
    %66 = arith.mulf %1, %65 : vector<8x128xf32>
    %c11 = arith.constant 11 : index
    %67 = memref.load %arg1[%c11] : memref<64xf32, #tpu.memory_space<smem>>
    %68 = vector.broadcast %67 : f32 to vector<8x128xf32>
    %69 = arith.mulf %3, %68 : vector<8x128xf32>
    %70 = arith.addf %66, %69 : vector<8x128xf32>
    %c21 = arith.constant 21 : index
    %71 = memref.load %arg1[%c21] : memref<64xf32, #tpu.memory_space<smem>>
    %72 = vector.broadcast %71 : f32 to vector<8x128xf32>
    %73 = arith.addf %70, %72 : vector<8x128xf32>
    %cst_10 = arith.constant 0.000000e+00 : f32
    %74 = vector.broadcast %cst_10 : f32 to vector<8x128xf32>
    %75 = arith.maximumf %73, %74 : vector<8x128xf32>
    %c12 = arith.constant 12 : index
    %76 = memref.load %arg1[%c12] : memref<64xf32, #tpu.memory_space<smem>>
    %77 = vector.broadcast %76 : f32 to vector<8x128xf32>
    %78 = arith.mulf %1, %77 : vector<8x128xf32>
    %c13 = arith.constant 13 : index
    %79 = memref.load %arg1[%c13] : memref<64xf32, #tpu.memory_space<smem>>
    %80 = vector.broadcast %79 : f32 to vector<8x128xf32>
    %81 = arith.mulf %3, %80 : vector<8x128xf32>
    %82 = arith.addf %78, %81 : vector<8x128xf32>
    %c22 = arith.constant 22 : index
    %83 = memref.load %arg1[%c22] : memref<64xf32, #tpu.memory_space<smem>>
    %84 = vector.broadcast %83 : f32 to vector<8x128xf32>
    %85 = arith.addf %82, %84 : vector<8x128xf32>
    %cst_11 = arith.constant 0.000000e+00 : f32
    %86 = vector.broadcast %cst_11 : f32 to vector<8x128xf32>
    %87 = arith.maximumf %85, %86 : vector<8x128xf32>
    %c14 = arith.constant 14 : index
    %88 = memref.load %arg1[%c14] : memref<64xf32, #tpu.memory_space<smem>>
    %89 = vector.broadcast %88 : f32 to vector<8x128xf32>
    %90 = arith.mulf %1, %89 : vector<8x128xf32>
    %c15 = arith.constant 15 : index
    %91 = memref.load %arg1[%c15] : memref<64xf32, #tpu.memory_space<smem>>
    %92 = vector.broadcast %91 : f32 to vector<8x128xf32>
    %93 = arith.mulf %3, %92 : vector<8x128xf32>
    %94 = arith.addf %90, %93 : vector<8x128xf32>
    %c23 = arith.constant 23 : index
    %95 = memref.load %arg1[%c23] : memref<64xf32, #tpu.memory_space<smem>>
    %96 = vector.broadcast %95 : f32 to vector<8x128xf32>
    %97 = arith.addf %94, %96 : vector<8x128xf32>
    %cst_12 = arith.constant 0.000000e+00 : f32
    %98 = vector.broadcast %cst_12 : f32 to vector<8x128xf32>
    %99 = arith.maximumf %97, %98 : vector<8x128xf32>
    %c24 = arith.constant 24 : index
    %100 = memref.load %arg1[%c24] : memref<64xf32, #tpu.memory_space<smem>>
    %101 = vector.broadcast %100 : f32 to vector<8x128xf32>
    %102 = arith.mulf %15, %101 : vector<8x128xf32>
    %c25 = arith.constant 25 : index
    %103 = memref.load %arg1[%c25] : memref<64xf32, #tpu.memory_space<smem>>
    %104 = vector.broadcast %103 : f32 to vector<8x128xf32>
    %105 = arith.mulf %27, %104 : vector<8x128xf32>
    %106 = arith.addf %102, %105 : vector<8x128xf32>
    %c26 = arith.constant 26 : index
    %107 = memref.load %arg1[%c26] : memref<64xf32, #tpu.memory_space<smem>>
    %108 = vector.broadcast %107 : f32 to vector<8x128xf32>
    %109 = arith.mulf %39, %108 : vector<8x128xf32>
    %110 = arith.addf %106, %109 : vector<8x128xf32>
    %c27 = arith.constant 27 : index
    %111 = memref.load %arg1[%c27] : memref<64xf32, #tpu.memory_space<smem>>
    %112 = vector.broadcast %111 : f32 to vector<8x128xf32>
    %113 = arith.mulf %51, %112 : vector<8x128xf32>
    %114 = arith.addf %110, %113 : vector<8x128xf32>
    %c28 = arith.constant 28 : index
    %115 = memref.load %arg1[%c28] : memref<64xf32, #tpu.memory_space<smem>>
    %116 = vector.broadcast %115 : f32 to vector<8x128xf32>
    %117 = arith.mulf %63, %116 : vector<8x128xf32>
    %118 = arith.addf %114, %117 : vector<8x128xf32>
    %c29 = arith.constant 29 : index
    %119 = memref.load %arg1[%c29] : memref<64xf32, #tpu.memory_space<smem>>
    %120 = vector.broadcast %119 : f32 to vector<8x128xf32>
    %121 = arith.mulf %75, %120 : vector<8x128xf32>
    %122 = arith.addf %118, %121 : vector<8x128xf32>
    %c30 = arith.constant 30 : index
    %123 = memref.load %arg1[%c30] : memref<64xf32, #tpu.memory_space<smem>>
    %124 = vector.broadcast %123 : f32 to vector<8x128xf32>
    %125 = arith.mulf %87, %124 : vector<8x128xf32>
    %126 = arith.addf %122, %125 : vector<8x128xf32>
    %c31 = arith.constant 31 : index
    %127 = memref.load %arg1[%c31] : memref<64xf32, #tpu.memory_space<smem>>
    %128 = vector.broadcast %127 : f32 to vector<8x128xf32>
    %129 = arith.mulf %99, %128 : vector<8x128xf32>
    %130 = arith.addf %126, %129 : vector<8x128xf32>
    %c48 = arith.constant 48 : index
    %131 = memref.load %arg1[%c48] : memref<64xf32, #tpu.memory_space<smem>>
    %132 = vector.broadcast %131 : f32 to vector<8x128xf32>
    %133 = arith.addf %130, %132 : vector<8x128xf32>
    %c0_13 = arith.constant 0 : index
    %c0_14 = arith.constant 0 : index
    %c0_15 = arith.constant 0 : index
    %134 = vector.load %arg3[%c0_13, %c0_14, %c0_15] : memref<3x8x128xf32, #tpu.memory_space<vmem>>, vector<1x8x128xf32>
    %135 = vector.shape_cast %134 : vector<1x8x128xf32> to vector<8x128xf32>
    %136 = vector.shape_cast %133 : vector<8x128xf32> to vector<1x8x128xf32>
    tpu.vector_store %arg3[%c0_13, %c0_14, %c0_15], %136 {strides = array<i32>} : memref<3x8x128xf32, #tpu.memory_space<vmem>>, vector<1x8x128xf32>,
    %c32 = arith.constant 32 : index
    %137 = memref.load %arg1[%c32] : memref<64xf32, #tpu.memory_space<smem>>
    %138 = vector.broadcast %137 : f32 to vector<8x128xf32>
    %139 = arith.mulf %15, %138 : vector<8x128xf32>
    %c33 = arith.constant 33 : index
    %140 = memref.load %arg1[%c33] : memref<64xf32, #tpu.memory_space<smem>>
    %141 = vector.broadcast %140 : f32 to vector<8x128xf32>
    %142 = arith.mulf %27, %141 : vector<8x128xf32>
    %143 = arith.addf %139, %142 : vector<8x128xf32>
    %c34 = arith.constant 34 : index
    %144 = memref.load %arg1[%c34] : memref<64xf32, #tpu.memory_space<smem>>
    %145 = vector.broadcast %144 : f32 to vector<8x128xf32>
    %146 = arith.mulf %39, %145 : vector<8x128xf32>
    %147 = arith.addf %143, %146 : vector<8x128xf32>
    %c35 = arith.constant 35 : index
    %148 = memref.load %arg1[%c35] : memref<64xf32, #tpu.memory_space<smem>>
    %149 = vector.broadcast %148 : f32 to vector<8x128xf32>
    %150 = arith.mulf %51, %149 : vector<8x128xf32>
    %151 = arith.addf %147, %150 : vector<8x128xf32>
    %c36 = arith.constant 36 : index
    %152 = memref.load %arg1[%c36] : memref<64xf32, #tpu.memory_space<smem>>
    %153 = vector.broadcast %152 : f32 to vector<8x128xf32>
    %154 = arith.mulf %63, %153 : vector<8x128xf32>
    %155 = arith.addf %151, %154 : vector<8x128xf32>
    %c37 = arith.constant 37 : index
    %156 = memref.load %arg1[%c37] : memref<64xf32, #tpu.memory_space<smem>>
    %157 = vector.broadcast %156 : f32 to vector<8x128xf32>
    %158 = arith.mulf %75, %157 : vector<8x128xf32>
    %159 = arith.addf %155, %158 : vector<8x128xf32>
    %c38 = arith.constant 38 : index
    %160 = memref.load %arg1[%c38] : memref<64xf32, #tpu.memory_space<smem>>
    %161 = vector.broadcast %160 : f32 to vector<8x128xf32>
    %162 = arith.mulf %87, %161 : vector<8x128xf32>
    %163 = arith.addf %159, %162 : vector<8x128xf32>
    %c39 = arith.constant 39 : index
    %164 = memref.load %arg1[%c39] : memref<64xf32, #tpu.memory_space<smem>>
    %165 = vector.broadcast %164 : f32 to vector<8x128xf32>
    %166 = arith.mulf %99, %165 : vector<8x128xf32>
    %167 = arith.addf %163, %166 : vector<8x128xf32>
    %c49 = arith.constant 49 : index
    %168 = memref.load %arg1[%c49] : memref<64xf32, #tpu.memory_space<smem>>
    %169 = vector.broadcast %168 : f32 to vector<8x128xf32>
    %170 = arith.addf %167, %169 : vector<8x128xf32>
    %c1_16 = arith.constant 1 : index
    %c0_17 = arith.constant 0 : index
    %c0_18 = arith.constant 0 : index
    %171 = vector.load %arg3[%c1_16, %c0_17, %c0_18] : memref<3x8x128xf32, #tpu.memory_space<vmem>>, vector<1x8x128xf32>
    %172 = vector.shape_cast %171 : vector<1x8x128xf32> to vector<8x128xf32>
    %173 = vector.shape_cast %170 : vector<8x128xf32> to vector<1x8x128xf32>
    tpu.vector_store %arg3[%c1_16, %c0_17, %c0_18], %173 {strides = array<i32>} : memref<3x8x128xf32, #tpu.memory_space<vmem>>, vector<1x8x128xf32>,
    %c40 = arith.constant 40 : index
    %174 = memref.load %arg1[%c40] : memref<64xf32, #tpu.memory_space<smem>>
    %175 = vector.broadcast %174 : f32 to vector<8x128xf32>
    %176 = arith.mulf %15, %175 : vector<8x128xf32>
    %c41 = arith.constant 41 : index
    %177 = memref.load %arg1[%c41] : memref<64xf32, #tpu.memory_space<smem>>
    %178 = vector.broadcast %177 : f32 to vector<8x128xf32>
    %179 = arith.mulf %27, %178 : vector<8x128xf32>
    %180 = arith.addf %176, %179 : vector<8x128xf32>
    %c42 = arith.constant 42 : index
    %181 = memref.load %arg1[%c42] : memref<64xf32, #tpu.memory_space<smem>>
    %182 = vector.broadcast %181 : f32 to vector<8x128xf32>
    %183 = arith.mulf %39, %182 : vector<8x128xf32>
    %184 = arith.addf %180, %183 : vector<8x128xf32>
    %c43 = arith.constant 43 : index
    %185 = memref.load %arg1[%c43] : memref<64xf32, #tpu.memory_space<smem>>
    %186 = vector.broadcast %185 : f32 to vector<8x128xf32>
    %187 = arith.mulf %51, %186 : vector<8x128xf32>
    %188 = arith.addf %184, %187 : vector<8x128xf32>
    %c44 = arith.constant 44 : index
    %189 = memref.load %arg1[%c44] : memref<64xf32, #tpu.memory_space<smem>>
    %190 = vector.broadcast %189 : f32 to vector<8x128xf32>
    %191 = arith.mulf %63, %190 : vector<8x128xf32>
    %192 = arith.addf %188, %191 : vector<8x128xf32>
    %c45 = arith.constant 45 : index
    %193 = memref.load %arg1[%c45] : memref<64xf32, #tpu.memory_space<smem>>
    %194 = vector.broadcast %193 : f32 to vector<8x128xf32>
    %195 = arith.mulf %75, %194 : vector<8x128xf32>
    %196 = arith.addf %192, %195 : vector<8x128xf32>
    %c46 = arith.constant 46 : index
    %197 = memref.load %arg1[%c46] : memref<64xf32, #tpu.memory_space<smem>>
    %198 = vector.broadcast %197 : f32 to vector<8x128xf32>
    %199 = arith.mulf %87, %198 : vector<8x128xf32>
    %200 = arith.addf %196, %199 : vector<8x128xf32>
    %c47 = arith.constant 47 : index
    %201 = memref.load %arg1[%c47] : memref<64xf32, #tpu.memory_space<smem>>
    %202 = vector.broadcast %201 : f32 to vector<8x128xf32>
    %203 = arith.mulf %99, %202 : vector<8x128xf32>
    %204 = arith.addf %200, %203 : vector<8x128xf32>
    %c50 = arith.constant 50 : index
    %205 = memref.load %arg1[%c50] : memref<64xf32, #tpu.memory_space<smem>>
    %206 = vector.broadcast %205 : f32 to vector<8x128xf32>
    %207 = arith.addf %204, %206 : vector<8x128xf32>
    %c2_19 = arith.constant 2 : index
    %c0_20 = arith.constant 0 : index
    %c0_21 = arith.constant 0 : index
    %208 = vector.load %arg3[%c2_19, %c0_20, %c0_21] : memref<3x8x128xf32, #tpu.memory_space<vmem>>, vector<1x8x128xf32>
    %209 = vector.shape_cast %208 : vector<1x8x128xf32> to vector<8x128xf32>
    %210 = vector.shape_cast %207 : vector<8x128xf32> to vector<1x8x128xf32>
    tpu.vector_store %arg3[%c2_19, %c0_20, %c0_21], %210 {strides = array<i32>} : memref<3x8x128xf32, #tpu.memory_space<vmem>>, vector<1x8x128xf32>,
    return
  }
  func.func @transform_0(%arg0: i32) -> i32 {
    %c0_i32 = arith.constant 0 : i32
    %c0_i32_0 = arith.constant 0 : i32
    return %c0_i32 : i32
  }
  func.func @transform_1(%arg0: i32) -> (i32, i32, i32) {
    %c0_i32 = arith.constant 0 : i32
    %c0_i32_0 = arith.constant 0 : i32
    %c0_i32_1 = arith.constant 0 : i32
    return %c0_i32, %arg0, %c0_i32_0 : i32, i32, i32
  }
  func.func @transform_2(%arg0: i32) -> (i32, i32, i32) {
    %c0_i32 = arith.constant 0 : i32
    %c0_i32_0 = arith.constant 0 : i32
    %c0_i32_1 = arith.constant 0 : i32
    return %c0_i32, %arg0, %c0_i32_0 : i32, i32, i32
  }
}

</mosaic_0001>

<llo_original>
// kernel: policy_network_forward.1
$region0: #{policy_network_forward.1}
  #allocation0 [shape = 'u32[]', space=smem, size = 0x4, offset = 0x4, fixed_abs, tag = 'smem constant byte address 0x4 - core index']
  #allocation1 [shape = 'u32[144,128]{1,0:T(1,128)}', space=vmem, size = 0x12000, scoped, tag = 'internal scratch']
  %s0 = inlined_call_operand.vmem [shape: f32[64], index: 0, kind: input, shape index: {}]
  %s1 = inlined_call_operand.vmem [shape: f32[2,8,128], index: 1, kind: input, shape index: {}]
  %s2 = inlined_call_operand.vmem [shape: f32[3,8,128], index: 2, kind: output, shape index: {}]
  %s3 = sld [smem:[#allocation0]]
  $region22: #{policy_network_forward.1} parent=0
    _
  %s5 = ssub.s32 1, %s3
  %s6 = scalar_select 0, %s5, %s3
  $region1: #{policy_network_forward.1} parent=0
    #allocation2 [shape = 'u8[512]{0}', space=smem, size = 0x200, scoped, tag = 'input window, operand 0, single buffered']
    #allocation3 [shape = 's32[1]{0}', space=sflag, size = 0x4, scoped, tag = 'scoped memory for policy_network_forward.1']
    %7 = vsyncpa [#allocation3], 0
    // Predicated region
    $region2: #{policy_network_forward.1} parent=1 // pred_check
      _
    $region3: #{policy_network_forward.1} parent=1 // pred_check_branch
      %9 = sbr.rel (0) target = $region5
    $region4: #{policy_network_forward.1} parent=1 // pred_region
      %s11 = ssub.s32 16, 16
      %12 = vsyncadd [#allocation3], %s11
      %s14 = sshll.u32 %s0, 4
      %s15 = int_to_ptr.vmem [resolvable:$true] %s14
      %17 = dma.vmem_to_smem %s15, 16, [#allocation2], [#allocation3]
    $region5: #{policy_network_forward.1} parent=1 // pred_fallthru
      _
    // Predicated region
    $region6: #{policy_network_forward.1} parent=1 // pred_check
      _
    $region7: #{policy_network_forward.1} parent=1 // pred_check_branch
      %19 = sbr.rel (0) target = $region9
    $region8: #{policy_network_forward.1} parent=1 // pred_region
      _
    $region9: #{policy_network_forward.1} parent=1 // pred_fallthru
      _
    // Predicated region
    $region10: #{policy_network_forward.1} parent=1 // pred_check
      _
    $region11: #{policy_network_forward.1} parent=1 // pred_check_branch
      %21 = sbr.rel (0) target = $region13
    $region12: #{policy_network_forward.1} parent=1 // pred_region
      %22 = dma.done [#allocation3], 16
    $region13: #{policy_network_forward.1} parent=1 // pred_fallthru
      _
    %23 = sfence
    %v24 = vld [vmem:[%s1] sm:$0xff]
    %s25 = scalar_lea.vmem %s1, 8
    %v26 = vld [vmem:[%s25] sm:$0xff]
    %s27 = sld [smem:[#allocation2]]
    %v28 = vstv %s27
    %v29 = vmul.f32 %v24, %v28
    %s30 = sld [smem:[#allocation2 + $0x1]]
    %v31 = vstv %s30
    %v32 = vmul.f32 %v26, %v31
    %v33 = vadd.f32 %v29, %v32
    %s34 = sld [smem:[#allocation2 + $0x10]]
    %v35 = vstv %s34
    %v36 = vadd.f32 %v33, %v35
    %v37 = vmax.f32 %v36, 0.0
    %s38 = sld [smem:[#allocation2 + $0x2]]
    %v39 = vstv %s38
    %v40 = vmul.f32 %v24, %v39
    %s41 = sld [smem:[#allocation2 + $0x3]]
    %v42 = vstv %s41
    %v43 = vmul.f32 %v26, %v42
    %v44 = vadd.f32 %v40, %v43
    %s45 = sld [smem:[#allocation2 + $0x11]]
    %v46 = vstv %s45
    %v47 = vadd.f32 %v44, %v46
    %v48 = vmax.f32 %v47, 0.0
    %s49 = sld [smem:[#allocation2 + $0x4]]
    %v50 = vstv %s49
    %v51 = vmul.f32 %v24, %v50
    %s52 = sld [smem:[#allocation2 + $0x5]]
    %v53 = vstv %s52
    %v54 = vmul.f32 %v26, %v53
    %v55 = vadd.f32 %v51, %v54
    %s56 = sld [smem:[#allocation2 + $0x12]]
    %v57 = vstv %s56
    %v58 = vadd.f32 %v55, %v57
    %v59 = vmax.f32 %v58, 0.0
    %s60 = sld [smem:[#allocation2 + $0x6]]
    %v61 = vstv %s60
    %v62 = vmul.f32 %v24, %v61
    %s63 = sld [smem:[#allocation2 + $0x7]]
    %v64 = vstv %s63
    %v65 = vmul.f32 %v26, %v64
    %v66 = vadd.f32 %v62, %v65
    %s67 = sld [smem:[#allocation2 + $0x13]]
    %v68 = vstv %s67
    %v69 = vadd.f32 %v66, %v68
    %v70 = vmax.f32 %v69, 0.0
    %s71 = sld [smem:[#allocation2 + $0x8]]
    %v72 = vstv %s71
    %v73 = vmul.f32 %v24, %v72
    %s74 = sld [smem:[#allocation2 + $0x9]]
    %v75 = vstv %s74
    %v76 = vmul.f32 %v26, %v75
    %v77 = vadd.f32 %v73, %v76
    %s78 = sld [smem:[#allocation2 + $0x14]]
    %v79 = vstv %s78
    %v80 = vadd.f32 %v77, %v79
    %v81 = vmax.f32 %v80, 0.0
    %s82 = sld [smem:[#allocation2 + $0xa]]
    %v83 = vstv %s82
    %v84 = vmul.f32 %v24, %v83
    %s85 = sld [smem:[#allocation2 + $0xb]]
    %v86 = vstv %s85
    %v87 = vmul.f32 %v26, %v86
    %v88 = vadd.f32 %v84, %v87
    %s89 = sld [smem:[#allocation2 + $0x15]]
    %v90 = vstv %s89
    %v91 = vadd.f32 %v88, %v90
    %v92 = vmax.f32 %v91, 0.0
    %s93 = sld [smem:[#allocation2 + $0xc]]
    %v94 = vstv %s93
    %v95 = vmul.f32 %v24, %v94
    %s96 = sld [smem:[#allocation2 + $0xd]]
    %v97 = vstv %s96
    %v98 = vmul.f32 %v26, %v97
    %v99 = vadd.f32 %v95, %v98
    %s100 = sld [smem:[#allocation2 + $0x16]]
    %v101 = vstv %s100
    %v102 = vadd.f32 %v99, %v101
    %v103 = vmax.f32 %v102, 0.0
    %s104 = sld [smem:[#allocation2 + $0xe]]
    %v105 = vstv %s104
    %v106 = vmul.f32 %v24, %v105
    %s107 = sld [smem:[#allocation2 + $0xf]]
    %v108 = vstv %s107
    %v109 = vmul.f32 %v26, %v108
    %v110 = vadd.f32 %v106, %v109
    %s111 = sld [smem:[#allocation2 + $0x17]]
    %v112 = vstv %s111
    %v113 = vadd.f32 %v110, %v112
    %v114 = vmax.f32 %v113, 0.0
    %s115 = sld [smem:[#allocation2 + $0x18]]
    %v116 = vstv %s115
    %v117 = vmul.f32 %v37, %v116
    %s118 = sld [smem:[#allocation2 + $0x19]]
    %v119 = vstv %s118
    %v120 = vmul.f32 %v48, %v119
    %v121 = vadd.f32 %v117, %v120
    %s122 = sld [smem:[#allocation2 + $0x1a]]
    %v123 = vstv %s122
    %v124 = vmul.f32 %v59, %v123
    %v125 = vadd.f32 %v121, %v124
    %s126 = sld [smem:[#allocation2 + $0x1b]]
    %v127 = vstv %s126
    %v128 = vmul.f32 %v70, %v127
    %v129 = vadd.f32 %v125, %v128
    %s130 = sld [smem:[#allocation2 + $0x1c]]
    %v131 = vstv %s130
    %v132 = vmul.f32 %v81, %v131
    %v133 = vadd.f32 %v129, %v132
    %s134 = sld [smem:[#allocation2 + $0x1d]]
    %v135 = vstv %s134
    %v136 = vmul.f32 %v92, %v135
    %v137 = vadd.f32 %v133, %v136
    %s138 = sld [smem:[#allocation2 + $0x1e]]
    %v139 = vstv %s138
    %v140 = vmul.f32 %v103, %v139
    %v141 = vadd.f32 %v137, %v140
    %s142 = sld [smem:[#allocation2 + $0x1f]]
    %v143 = vstv %s142
    %v144 = vmul.f32 %v114, %v143
    %v145 = vadd.f32 %v141, %v144
    %s146 = sld [smem:[#allocation2 + $0x30]]
    %v147 = vstv %s146
    %v148 = vadd.f32 %v145, %v147
    %149 = vst [vmem:[%s2] sm:$0xff] %v148
    %s150 = sld [smem:[#allocation2 + $0x20]]
    %v151 = vstv %s150
    %v152 = vmul.f32 %v37, %v151
    %s153 = sld [smem:[#allocation2 + $0x21]]
    %v154 = vstv %s153
    %v155 = vmul.f32 %v48, %v154
    %v156 = vadd.f32 %v152, %v155
    %s157 = sld [smem:[#allocation2 + $0x22]]
    %v158 = vstv %s157
    %v159 = vmul.f32 %v59, %v158
    %v160 = vadd.f32 %v156, %v159
    %s161 = sld [smem:[#allocation2 + $0x23]]
    %v162 = vstv %s161
    %v163 = vmul.f32 %v70, %v162
    %v164 = vadd.f32 %v160, %v163
    %s165 = sld [smem:[#allocation2 + $0x24]]
    %v166 = vstv %s165
    %v167 = vmul.f32 %v81, %v166
    %v168 = vadd.f32 %v164, %v167
    %s169 = sld [smem:[#allocation2 + $0x25]]
    %v170 = vstv %s169
    %v171 = vmul.f32 %v92, %v170
    %v172 = vadd.f32 %v168, %v171
    %s173 = sld [smem:[#allocation2 + $0x26]]
    %v174 = vstv %s173
    %v175 = vmul.f32 %v103, %v174
    %v176 = vadd.f32 %v172, %v175
    %s177 = sld [smem:[#allocation2 + $0x27]]
    %v178 = vstv %s177
    %v179 = vmul.f32 %v114, %v178
    %v180 = vadd.f32 %v176, %v179
    %s181 = sld [smem:[#allocation2 + $0x31]]
    %v182 = vstv %s181
    %v183 = vadd.f32 %v180, %v182
    %s184 = scalar_lea.vmem %s2, 8
    %185 = vst [vmem:[%s184] sm:$0xff] %v183
    %s186 = sld [smem:[#allocation2 + $0x28]]
    %v187 = vstv %s186
    %v188 = vmul.f32 %v37, %v187
    %s189 = sld [smem:[#allocation2 + $0x29]]
    %v190 = vstv %s189
    %v191 = vmul.f32 %v48, %v190
    %v192 = vadd.f32 %v188, %v191
    %s193 = sld [smem:[#allocation2 + $0x2a]]
    %v194 = vstv %s193
    %v195 = vmul.f32 %v59, %v194
    %v196 = vadd.f32 %v192, %v195
    %s197 = sld [smem:[#allocation2 + $0x2b]]
    %v198 = vstv %s197
    %v199 = vmul.f32 %v70, %v198
    %v200 = vadd.f32 %v196, %v199
    %s201 = sld [smem:[#allocation2 + $0x2c]]
    %v202 = vstv %s201
    %v203 = vmul.f32 %v81, %v202
    %v204 = vadd.f32 %v200, %v203
    %s205 = sld [smem:[#allocation2 + $0x2d]]
    %v206 = vstv %s205
    %v207 = vmul.f32 %v92, %v206
    %v208 = vadd.f32 %v204, %v207
    %s209 = sld [smem:[#allocation2 + $0x2e]]
    %v210 = vstv %s209
    %v211 = vmul.f32 %v103, %v210
    %v212 = vadd.f32 %v208, %v211
    %s213 = sld [smem:[#allocation2 + $0x2f]]
    %v214 = vstv %s213
    %v215 = vmul.f32 %v114, %v214
    %v216 = vadd.f32 %v212, %v215
    %s217 = sld [smem:[#allocation2 + $0x32]]
    %v218 = vstv %s217
    %v219 = vadd.f32 %v216, %v218
    %s220 = scalar_lea.vmem %s2, 16
    %221 = vst [vmem:[%s220] sm:$0xff] %v219
    // Predicated region
    $region14: #{policy_network_forward.1} parent=1 // pred_check
      _
    $region15: #{policy_network_forward.1} parent=1 // pred_check_branch
      %223 = sbr.rel (0) target = $region17
    $region16: #{policy_network_forward.1} parent=1 // pred_region
      _
    $region17: #{policy_network_forward.1} parent=1 // pred_fallthru
      _
    // Predicated region
    $region18: #{policy_network_forward.1} parent=1 // pred_check
      _
    $region19: #{policy_network_forward.1} parent=1 // pred_check_branch
      %225 = sbr.rel (0) target = $region21
    $region20: #{policy_network_forward.1} parent=1 // pred_region
      _
    $region21: #{policy_network_forward.1} parent=1 // pred_fallthru
      _
    %226 = vsyncpa [#allocation3], 1

</llo_original>
